<compile_context>
chip_gen: v5e
topology: v5e:2x2
jax: 0.10.0
libtpu: 0.0.40
codegen_flags: <defaults>
</compile_context>

<pallas_src>
import functools

import numpy as np
import jax
import jax.numpy as jnp
from jax import lax
from jax.experimental import pallas as pl
from jax.experimental.pallas import tpu as pltpu

_SQRT_HALF = 0.7071067811865476  # 1/sqrt(2) for exact erf-GELU


# ----------------------------- fused Pallas kernel -----------------------------

def _fik_kernel(in_dim, n, z0, dz, z_num,
                q_ref, y_ref, w1t_ref, w2t_ref, vec_ref,
                o_ref, acc_ref):
    """One grid step = one batch element x one lane-tile of `tn` samples.

    Layout: features on sublanes, samples on lanes, so every intermediate is lane-dense,
    fc2 and the segment reduction are plain MXU dots, and the output is produced directly
    in (B, in_dim, z_num) layout.  sums+counts accumulate in a single VMEM scratch across
    n-tiles (counts live in row `in_dim`).
    """
    t = pl.program_id(1)

    @pl.when(t == 0)
    def _init():
        acc_ref[...] = jnp.zeros_like(acc_ref)

    q = q_ref[0]                      # (1, tn)
    y = y_ref[0]                      # (in_dim, tn)
    tn = q.shape[1]

    # Lane-validity mask for the ragged last tile (no wrapper-side jnp.pad): lanes past n
    # read unspecified HBM bytes and must not contribute.
    lane = lax.broadcasted_iota(jnp.int32, (1, tn), 1)
    valid = (t * tn + lane) < n                                            # (1, tn) bool

    # _get_z, arithmetically: idx = ceil((x - z[0] - dz/2)/dz); z = z0 + idx*dz.
    idx_f = jnp.ceil((q - z0 - dz * 0.5) / dz)
    zvals = z0 + idx_f * dz                                                # (1, tn)
    # invalid lanes -> out-of-range bin -> all-zero one-hot column
    idx = jnp.where(valid, idx_f.astype(jnp.int32), jnp.int32(-1))         # (1, tn)

    row = lax.broadcasted_iota(jnp.int32, (z_num, tn), 0)
    onehot = (row == idx).astype(jnp.float32)                              # (z_num, tn)

    # packed per-feature vectors: columns = [b1, gamma, beta, b2 (zero-padded)]
    vec = vec_ref[...]                # (H, 4)
    b1, gamma, beta = vec[:, 0:1], vec[:, 1:2], vec[:, 2:3]
    b2 = vec[:in_dim, 3:4]            # (in_dim, 1)

    # FCBlock.fc1 on kernel_input = [x, z, y]^T without the concat: every column of W1 is a
    # rank-1 VPU broadcast-MAC (no degenerate K=2 MXU dot).
    w1t = w1t_ref[...]                # (H, in_dim + 2)
    h = w1t[:, 0:1] * q + w1t[:, 1:2] * zvals + b1                         # (H, tn)
    for d in range(in_dim):           # static unroll over features
        h = h + w1t[:, 2 + d:3 + d] * y[d:d + 1, :]

    # LayerNorm over the feature (sublane) axis; eps matches nn.LayerNorm default.
    mu = jnp.mean(h, axis=0, keepdims=True)
    var = jnp.mean((h - mu) ** 2, axis=0, keepdims=True)
    h = (h - mu) * lax.rsqrt(var + 1e-5) * gamma + beta

    # exact erf-GELU (torch.nn.GELU default)
    h = 0.5 * h * (1.0 + lax.erf(h * _SQRT_HALF))

    # FCBlock.fc2 (K = H, MXU)
    out = jnp.dot(w2t_ref[...], h, preferred_element_type=jnp.float32) + b2   # (in_dim, tn)

    # output * y, masked with where (NOT multiply-by-zero: garbage tail bytes may be NaN/Inf),
    # then ONE fused sums+counts contraction over the lane axis (compute_means).
    vals = jnp.where(valid, out * y, 0.0)                                  # (in_dim, tn)
    ones = jnp.ones((1, tn), jnp.float32)
    lhs = jnp.concatenate([vals, ones], axis=0)                            # (in_dim+1, tn)
    dn = (((1,), (1,)), ((), ()))     # contract the sample (lane) axis of both operands
    acc_ref[...] += lax.dot_general(lhs, onehot, dn,
                                    preferred_element_type=jnp.float32)   # (in_dim+1, z_num)

    @pl.when(t == pl.num_programs(1) - 1)
    def _finalize():
        acc = acc_ref[...]
        sums = acc[:in_dim, :]                                             # (in_dim, z_num)
        counts = acc[in_dim:in_dim + 1, :]                                 # (1, z_num)
        # mean = sums / counts.clamp(min=1); empty bins -> 0 (matches the PyTorch code)
        o_ref[0] = sums / jnp.maximum(counts, 1.0)


# ----------------------------- wrapper -----------------------------

def fast_integral_kernel_forward(q, y, params, z0, z1, z_num, *, tile_n=4096):
    """FastIntegralKernel.forward (drop_mask=None) as one fused pallas_call.

    q: (B, n) float32                  -- `x` in the PyTorch module
    y: (B, n, in_dim) float32
    params = (w1, b1, gamma, beta, w2, b2), w1: (in_dim+2, H), w2: (H, in_dim)
    returns (B, in_dim, z_num) float32
    """
    w1, b1, gamma, beta, w2, b2 = params
    B, n = q.shape
    in_dim = y.shape[-1]
    H = w1.shape[1]
    assert w1.shape == (in_dim + 2, H) and w2.shape == (H, in_dim)
    assert n < (1 << 24), "f32 segment counts are exact only up to ~2^24 samples per bin"

    # z grid, matching torch.linspace(z0, z1, z_num) in float32
    zgrid = np.linspace(z0, z1, z_num, dtype=np.float32)
    dz = float(zgrid[1] - zgrid[0])
    z0f = float(zgrid[0])

    # Lane-axis tiling of the sample dimension.  tn must be a multiple of 128 or == n.
    # Big tiles: per-grid-step fixed overhead (~0.35 us) dominated at 512 lanes; at 4096
    # lanes the per-step temporaries (h, onehot, double-buffered q/y blocks) are ~1-2 MiB,
    # far under the scoped VMEM limits on v5e/v6e/v7x, so no vmem_limit_bytes override needed.
    assert tile_n % 128 == 0
    if n < 128:
        tn = n
    elif n % 128 == 0:
        tn = min(n, tile_n)
    else:
        tn = min(tile_n, (n // 128) * 128)
    n_tiles = (n + tn - 1) // tn

    # No jnp.pad: the ragged last tile is masked in-kernel.  Samples go on the lane axis.
    q3 = q.astype(jnp.float32).reshape(B, 1, n)
    y3 = jnp.swapaxes(y.astype(jnp.float32), 1, 2)                         # (B, in_dim, n)

    w1t = jnp.transpose(w1).astype(jnp.float32)                            # (H, in_dim + 2)
    w2t = jnp.transpose(w2).astype(jnp.float32)                            # (in_dim, H)
    b2p = jnp.zeros((H,), jnp.float32).at[:in_dim].set(b2)
    vecs = jnp.stack([b1, gamma, beta, b2p], axis=1).astype(jnp.float32)   # (H, 4): 1 DMA

    kernel = functools.partial(_fik_kernel, in_dim, n, z0f, dz, z_num)

    return pl.pallas_call(
        kernel,
        out_shape=jax.ShapeDtypeStruct((B, in_dim, z_num), jnp.float32),
        grid_spec=pltpu.PrefetchScalarGridSpec(
            num_scalar_prefetch=0,
            grid=(B, n_tiles),                          # reduction (n) axis last
            in_specs=[
                pl.BlockSpec((1, 1, tn), lambda b, t: (b, 0, t)),          # q
                pl.BlockSpec((1, in_dim, tn), lambda b, t: (b, 0, t)),     # y (feature-major)
                pl.BlockSpec((H, in_dim + 2), lambda b, t: (0, 0)),        # W1^T
                pl.BlockSpec((in_dim, H), lambda b, t: (0, 0)),            # W2^T
                pl.BlockSpec((H, 4), lambda b, t: (0, 0)),                 # packed vectors
            ],
            out_specs=pl.BlockSpec((1, in_dim, z_num), lambda b, t: (b, 0, 0)),
            scratch_shapes=[
                pltpu.VMEM((in_dim + 1, z_num), jnp.float32),  # fused segment sums + counts
            ],
        ),
        compiler_params=pltpu.CompilerParams(
            dimension_semantics=("parallel", "arbitrary")),
    )(q3, y3, w1t, w2t, vecs)


# ----------------------------- pure-JAX reference -----------------------------

def fast_integral_kernel_reference(q, y, params, z0, z1, z_num):
    w1, b1, gamma, beta, w2, b2 = params
    zbuf = jnp.asarray(np.linspace(z0, z1, z_num, dtype=np.float32))
    dz = zbuf[1] - zbuf[0]
    idx = jnp.ceil((q - zbuf[0] - dz * 0.5) / dz).astype(jnp.int32)        # (B, n)
    zvals = jnp.take(zbuf, idx.reshape(-1)).reshape(q.shape)
    kin = jnp.concatenate([q[..., None], zvals[..., None], y], axis=-1)    # (B, n, in_dim+2)
    h = kin @ w1 + b1
    mu = jnp.mean(h, axis=-1, keepdims=True)
    var = jnp.mean((h - mu) ** 2, axis=-1, keepdims=True)
    h = (h - mu) * lax.rsqrt(var + 1e-5) * gamma + beta
    h = 0.5 * h * (1.0 + lax.erf(h * _SQRT_HALF))
    out = h @ w2 + b2
    vals = out * y                                                         # (B, n, in_dim)
    onehot = (idx[..., None] == jnp.arange(z_num)[None, None, :]).astype(jnp.float32)
    sums = jnp.einsum("bnz,bnd->bzd", onehot, vals)
    counts = jnp.sum(onehot, axis=1)                                       # (B, z)
    means = sums / jnp.maximum(counts[..., None], 1.0)
    return jnp.swapaxes(means, 1, 2)                                       # (B, in_dim, z_num)


# ----------------------------- demo / self-check -----------------------------

if __name__ == "__main__":
    # Module config: FastIntegralKernel(z=(0., 1., 32), kernel_coef=8, in_dim=2, 'gelu')
    B, n = 2, 200                                # n not a multiple of 128 -> ragged last tile
    in_dim, kernel_coef = 2, 8
    z0, z1, z_num = 0.0, 1.0, 32
    H = kernel_coef * in_dim                     # 16

    key = jax.random.PRNGKey(0)
    kw1, kw2, kq, ky = jax.random.split(key, 4)

    def init_linear(k, fan_in, fan_out):
        ka, kb = jax.random.split(k)
        bound = 1.0 / float(fan_in) ** 0.5
        w = jax.random.uniform(ka, (fan_in, fan_out), jnp.float32, -bound, bound)
        b = jax.random.uniform(kb, (fan_out,), jnp.float32, -bound, bound)
        return w, b

    w1, b1 = init_linear(kw1, in_dim + 2, H)
    w2, b2 = init_linear(kw2, H, in_dim)
    gamma = jnp.ones((H,), jnp.float32)          # nn.LayerNorm default affine init
    beta = jnp.zeros((H,), jnp.float32)
    params = (w1, b1, gamma, beta, w2, b2)

    q = jax.random.uniform(kq, (B, n), jnp.float32, 0.0, 1.0)   # x inside [z0, z1]
    y = jax.random.normal(ky, (B, n, in_dim), dtype=jnp.float32)

    fwd = jax.jit(lambda q_, y_, p_: fast_integral_kernel_forward(q_, y_, p_, z0, z1, z_num))
    out = jax.block_until_ready(fwd(q, y, params))
    assert out.shape == (B, in_dim, z_num), out.shape
    assert bool(jnp.all(jnp.isfinite(out)))

    ref = jax.block_until_ready(fast_integral_kernel_reference(q, y, params, z0, z1, z_num))
    err = float(jnp.max(jnp.abs(out - ref)))
    assert err < 1e-3, f"max abs err vs pure-JAX reference: {err}"

    print("KERNEL_OK")
</pallas_src>

<mosaic_0001>
module attributes {stable_mosaic.version = 11 : i64} {
  func.func @_fik_kernel(%arg0: i32, %arg1: i32, %arg2: memref<1x1x128xf32, #tpu.memory_space<vmem>>, %arg3: memref<1x2x128xf32, #tpu.memory_space<vmem>>, %arg4: memref<16x4xf32, #tpu.memory_space<vmem>>, %arg5: memref<2x16xf32, #tpu.memory_space<vmem>>, %arg6: memref<16x4xf32, #tpu.memory_space<vmem>>, %arg7: memref<1x2x32xf32, #tpu.memory_space<vmem>>, %arg8: memref<3x32xf32, #tpu.memory_space<vmem>>) attributes {dimension_semantics = [#tpu.dimension_semantics<parallel>, #tpu.dimension_semantics<arbitrary>], iteration_bounds = array<i64: 2, 2>, scalar_prefetch = 0 : i64, scratch_operands = 1 : i64, tpu.core_type = #tpu.core_type<tc>, window_params = [{transform_indices = @transform_0, window_bounds = array<i64: 1, 1, 128>}, {transform_indices = @transform_1, window_bounds = array<i64: 1, 2, 128>}, {pipeline_mode = #tpu.pipeline_mode<synchronous>, transform_indices = @transform_2, window_bounds = array<i64: 16, 4>}, {pipeline_mode = #tpu.pipeline_mode<synchronous>, transform_indices = @transform_3, window_bounds = array<i64: 2, 16>}, {pipeline_mode = #tpu.pipeline_mode<synchronous>, transform_indices = @transform_4, window_bounds = array<i64: 16, 4>}, {transform_indices = @transform_5, window_bounds = array<i64: 1, 2, 32>}]} {
    %c0_i32 = arith.constant 0 : i32
    %0 = arith.cmpi eq, %arg1, %c0_i32 : i32
    %1 = arith.extui %0 : i1 to i32
    %c0_i32_0 = arith.constant 0 : i32
    %2 = arith.cmpi ne, %1, %c0_i32_0 : i32
    scf.if %2 {
      %cst_33 = arith.constant 0.000000e+00 : f32
      %109 = vector.broadcast %cst_33 : f32 to vector<3x32xf32>
      %c0_34 = arith.constant 0 : index
      %c0_35 = arith.constant 0 : index
      %110 = vector.load %arg8[%c0_34, %c0_35] : memref<3x32xf32, #tpu.memory_space<vmem>>, vector<3x32xf32>
      tpu.vector_store %arg8[%c0_34, %c0_35], %109 {strides = array<i32>} : memref<3x32xf32, #tpu.memory_space<vmem>>, vector<3x32xf32>,
    } else {
    }
    %c0 = arith.constant 0 : index
    %c0_1 = arith.constant 0 : index
    %c0_2 = arith.constant 0 : index
    %3 = vector.load %arg2[%c0, %c0_1, %c0_2] : memref<1x1x128xf32, #tpu.memory_space<vmem>>, vector<1x1x128xf32>
    %4 = vector.shape_cast %3 : vector<1x1x128xf32> to vector<1x128xf32>
    %c0_3 = arith.constant 0 : index
    %c0_4 = arith.constant 0 : index
    %c0_5 = arith.constant 0 : index
    %5 = vector.load %arg3[%c0_3, %c0_4, %c0_5] : memref<1x2x128xf32, #tpu.memory_space<vmem>>, vector<1x2x128xf32>
    %6 = vector.shape_cast %5 : vector<1x2x128xf32> to vector<2x128xf32>
    %7 = tpu.iota {dimensions = array<i32: 1>} : vector<1x128xi32>
    %c128_i32 = arith.constant 128 : i32
    %8 = arith.muli %arg1, %c128_i32 : i32
    %9 = vector.broadcast %8 : i32 to vector<1x128xi32>
    %10 = arith.addi %9, %7 : vector<1x128xi32>
    %c200_i32 = arith.constant 200 : i32
    %11 = vector.broadcast %c200_i32 : i32 to vector<1x128xi32>
    %12 = arith.cmpi slt, %10, %11 : vector<1x128xi32>
    %cst = arith.constant 0.000000e+00 : f32
    %13 = vector.broadcast %cst : f32 to vector<1x128xf32>
    %14 = arith.subf %4, %13 : vector<1x128xf32>
    %cst_6 = arith.constant 0.0161290318 : f32
    %15 = vector.broadcast %cst_6 : f32 to vector<1x128xf32>
    %16 = arith.subf %14, %15 : vector<1x128xf32>
    %cst_7 = arith.constant 0.0322580636 : f32
    %17 = vector.broadcast %cst_7 : f32 to vector<1x128xf32>
    %18 = arith.divf %16, %17 : vector<1x128xf32>
    %19 = math.ceil %18 : vector<1x128xf32>
    %cst_8 = arith.constant 0.0322580636 : f32
    %20 = vector.broadcast %cst_8 : f32 to vector<1x128xf32>
    %21 = arith.mulf %19, %20 : vector<1x128xf32>
    %cst_9 = arith.constant 0.000000e+00 : f32
    %22 = vector.broadcast %cst_9 : f32 to vector<1x128xf32>
    %23 = arith.addf %22, %21 : vector<1x128xf32>
    %24 = arith.fptosi %19 : vector<1x128xf32> to vector<1x128xi32>
    %c-1_i32 = arith.constant -1 : i32
    %25 = vector.broadcast %c-1_i32 : i32 to vector<1x128xi32>
    %26 = arith.select %12, %24, %25 : vector<1x128xi1>, vector<1x128xi32>
    %27 = tpu.iota {dimensions = array<i32: 0>} : vector<32x128xi32>
    %28 = vector.broadcast %26 : vector<1x128xi32> to vector<32x128xi32>
    %29 = arith.cmpi eq, %27, %28 : vector<32x128xi32>
    %30 = arith.extui %29 : vector<32x128xi1> to vector<32x128xi32>
    %31 = arith.sitofp %30 : vector<32x128xi32> to vector<32x128xf32>
    %c0_10 = arith.constant 0 : index
    %c0_11 = arith.constant 0 : index
    %32 = vector.load %arg6[%c0_10, %c0_11] : memref<16x4xf32, #tpu.memory_space<vmem>>, vector<16x4xf32>
    %33 = vector.extract_strided_slice %32 {offsets = [0, 0], sizes = [16, 1], strides = [1, 1]} : vector<16x4xf32> to vector<16x1xf32>
    %34 = vector.extract_strided_slice %32 {offsets = [0, 1], sizes = [16, 1], strides = [1, 1]} : vector<16x4xf32> to vector<16x1xf32>
    %35 = vector.extract_strided_slice %32 {offsets = [0, 2], sizes = [16, 1], strides = [1, 1]} : vector<16x4xf32> to vector<16x1xf32>
    %36 = vector.extract_strided_slice %32 {offsets = [0, 3], sizes = [2, 1], strides = [1, 1]} : vector<16x4xf32> to vector<2x1xf32>
    %c0_12 = arith.constant 0 : index
    %c0_13 = arith.constant 0 : index
    %37 = vector.load %arg4[%c0_12, %c0_13] : memref<16x4xf32, #tpu.memory_space<vmem>>, vector<16x4xf32>
    %38 = vector.extract_strided_slice %37 {offsets = [0, 0], sizes = [16, 1], strides = [1, 1]} : vector<16x4xf32> to vector<16x1xf32>
    %39 = vector.broadcast %38 : vector<16x1xf32> to vector<16x128xf32>
    %40 = vector.broadcast %4 : vector<1x128xf32> to vector<16x128xf32>
    %41 = arith.mulf %39, %40 : vector<16x128xf32>
    %42 = vector.extract_strided_slice %37 {offsets = [0, 1], sizes = [16, 1], strides = [1, 1]} : vector<16x4xf32> to vector<16x1xf32>
    %43 = vector.broadcast %42 : vector<16x1xf32> to vector<16x128xf32>
    %44 = vector.broadcast %23 : vector<1x128xf32> to vector<16x128xf32>
    %45 = arith.mulf %43, %44 : vector<16x128xf32>
    %46 = arith.addf %41, %45 : vector<16x128xf32>
    %47 = vector.broadcast %33 : vector<16x1xf32> to vector<16x128xf32>
    %48 = arith.addf %46, %47 : vector<16x128xf32>
    %49 = vector.extract_strided_slice %37 {offsets = [0, 2], sizes = [16, 1], strides = [1, 1]} : vector<16x4xf32> to vector<16x1xf32>
    %50 = vector.extract_strided_slice %6 {offsets = [0, 0], sizes = [1, 128], strides = [1, 1]} : vector<2x128xf32> to vector<1x128xf32>
    %51 = vector.broadcast %49 : vector<16x1xf32> to vector<16x128xf32>
    %52 = vector.broadcast %50 : vector<1x128xf32> to vector<16x128xf32>
    %53 = arith.mulf %51, %52 : vector<16x128xf32>
    %54 = arith.addf %48, %53 : vector<16x128xf32>
    %55 = vector.extract_strided_slice %37 {offsets = [0, 3], sizes = [16, 1], strides = [1, 1]} : vector<16x4xf32> to vector<16x1xf32>
    %56 = vector.extract_strided_slice %6 {offsets = [1, 0], sizes = [1, 128], strides = [1, 1]} : vector<2x128xf32> to vector<1x128xf32>
    %57 = vector.broadcast %55 : vector<16x1xf32> to vector<16x128xf32>
    %58 = vector.broadcast %56 : vector<1x128xf32> to vector<16x128xf32>
    %59 = arith.mulf %57, %58 : vector<16x128xf32>
    %60 = arith.addf %54, %59 : vector<16x128xf32>
    %cst_14 = arith.constant dense<0.000000e+00> : vector<128xf32>
    %61 = vector.multi_reduction <add>, %60, %cst_14 [0] : vector<16x128xf32> to vector<128xf32>
    %62 = vector.shape_cast %61 : vector<128xf32> to vector<1x128xf32>
    %cst_15 = arith.constant 1.600000e+01 : f32
    %63 = vector.broadcast %cst_15 : f32 to vector<1x128xf32>
    %64 = arith.divf %62, %63 : vector<1x128xf32>
    %65 = vector.broadcast %64 : vector<1x128xf32> to vector<16x128xf32>
    %66 = arith.subf %60, %65 : vector<16x128xf32>
    %67 = arith.mulf %66, %66 : vector<16x128xf32>
    %cst_16 = arith.constant dense<0.000000e+00> : vector<128xf32>
    %68 = vector.multi_reduction <add>, %67, %cst_16 [0] : vector<16x128xf32> to vector<128xf32>
    %69 = vector.shape_cast %68 : vector<128xf32> to vector<1x128xf32>
    %cst_17 = arith.constant 1.600000e+01 : f32
    %70 = vector.broadcast %cst_17 : f32 to vector<1x128xf32>
    %71 = arith.divf %69, %70 : vector<1x128xf32>
    %72 = vector.broadcast %64 : vector<1x128xf32> to vector<16x128xf32>
    %73 = arith.subf %60, %72 : vector<16x128xf32>
    %cst_18 = arith.constant 9.99999974E-6 : f32
    %74 = vector.broadcast %cst_18 : f32 to vector<1x128xf32>
    %75 = arith.addf %71, %74 : vector<1x128xf32>
    %76 = math.rsqrt %75 : vector<1x128xf32>
    %77 = vector.broadcast %76 : vector<1x128xf32> to vector<16x128xf32>
    %78 = arith.mulf %73, %77 : vector<16x128xf32>
    %79 = vector.broadcast %34 : vector<16x1xf32> to vector<16x128xf32>
    %80 = arith.mulf %78, %79 : vector<16x128xf32>
    %81 = vector.broadcast %35 : vector<16x1xf32> to vector<16x128xf32>
    %82 = arith.addf %80, %81 : vector<16x128xf32>
    %cst_19 = arith.constant 5.000000e-01 : f32
    %83 = vector.broadcast %cst_19 : f32 to vector<16x128xf32>
    %84 = arith.mulf %83, %82 : vector<16x128xf32>
    %cst_20 = arith.constant 0.707106769 : f32
    %85 = vector.broadcast %cst_20 : f32 to vector<16x128xf32>
    %86 = arith.mulf %82, %85 : vector<16x128xf32>
    %87 = math.erf %86 : vector<16x128xf32>
    %cst_21 = arith.constant 1.000000e+00 : f32
    %88 = vector.broadcast %cst_21 : f32 to vector<16x128xf32>
    %89 = arith.addf %88, %87 : vector<16x128xf32>
    %90 = arith.mulf %84, %89 : vector<16x128xf32>
    %c0_22 = arith.constant 0 : index
    %c0_23 = arith.constant 0 : index
    %91 = vector.load %arg5[%c0_22, %c0_23] : memref<2x16xf32, #tpu.memory_space<vmem>>, vector<2x16xf32>
    %cst_24 = arith.constant dense<0.000000e+00> : vector<2x128xf32>
    %92 = tpu.matmul %91, %90, %cst_24 {dimension_numbers = #tpu.dot_dimension_numbers<[1], [0], [0], [1], [0, 0, 1, 1], [], []>} : vector<2x16xf32>, vector<16x128xf32>, vector<2x128xf32> -> vector<2x128xf32>
    %93 = vector.broadcast %36 : vector<2x1xf32> to vector<2x128xf32>
    %94 = arith.addf %92, %93 : vector<2x128xf32>
    %95 = arith.mulf %94, %6 : vector<2x128xf32>
    %cst_25 = arith.constant 0.000000e+00 : f32
    %96 = vector.shape_cast %12 : vector<1x128xi1> to vector<1x128xi1>
    %97 = vector.broadcast %96 : vector<1x128xi1> to vector<2x128xi1>
    %98 = vector.broadcast %cst_25 : f32 to vector<2x128xf32>
    %99 = arith.select %97, %95, %98 : vector<2x128xi1>, vector<2x128xf32>
    %cst_26 = arith.constant 1.000000e+00 : f32
    %100 = vector.broadcast %cst_26 : f32 to vector<1x128xf32>
    %101 = tpu.concatenate %99, %100 in 0 : vector<2x128xf32>, vector<1x128xf32> -> vector<3x128xf32>
    %c0_27 = arith.constant 0 : index
    %c0_28 = arith.constant 0 : index
    %102 = vector.load %arg8[%c0_27, %c0_28] : memref<3x32xf32, #tpu.memory_space<vmem>>, vector<3x32xf32>
    %cst_29 = arith.constant dense<0.000000e+00> : vector<3x32xf32>
    %103 = tpu.matmul %101, %31, %cst_29 {dimension_numbers = #tpu.dot_dimension_numbers<[1], [1], [0], [0], [0, 0, 1, 0], [], []>} : vector<3x128xf32>, vector<32x128xf32>, vector<3x32xf32> -> vector<3x32xf32>
    %104 = arith.addf %102, %103 : vector<3x32xf32>
    %c0_30 = arith.constant 0 : index
    %c0_31 = arith.constant 0 : index
    %105 = vector.load %arg8[%c0_30, %c0_31] : memref<3x32xf32, #tpu.memory_space<vmem>>, vector<3x32xf32>
    tpu.vector_store %arg8[%c0_30, %c0_31], %104 {strides = array<i32>} : memref<3x32xf32, #tpu.memory_space<vmem>>, vector<3x32xf32>,
    %c1_i32 = arith.constant 1 : i32
    %106 = arith.cmpi eq, %arg1, %c1_i32 : i32
    %107 = arith.extui %106 : i1 to i32
    %c0_i32_32 = arith.constant 0 : i32
    %108 = arith.cmpi ne, %107, %c0_i32_32 : i32
    scf.if %108 {
      %c0_33 = arith.constant 0 : index
      %c0_34 = arith.constant 0 : index
      %109 = vector.load %arg8[%c0_33, %c0_34] : memref<3x32xf32, #tpu.memory_space<vmem>>, vector<3x32xf32>
      %110 = vector.extract_strided_slice %109 {offsets = [0, 0], sizes = [2, 32], strides = [1, 1]} : vector<3x32xf32> to vector<2x32xf32>
      %111 = vector.extract_strided_slice %109 {offsets = [2, 0], sizes = [1, 32], strides = [1, 1]} : vector<3x32xf32> to vector<1x32xf32>
      %cst_35 = arith.constant 1.000000e+00 : f32
      %112 = vector.broadcast %cst_35 : f32 to vector<1x32xf32>
      %113 = arith.maximumf %111, %112 : vector<1x32xf32>
      %114 = vector.broadcast %113 : vector<1x32xf32> to vector<2x32xf32>
      %115 = arith.divf %110, %114 : vector<2x32xf32>
      %c0_36 = arith.constant 0 : index
      %c0_37 = arith.constant 0 : index
      %c0_38 = arith.constant 0 : index
      %116 = vector.load %arg7[%c0_36, %c0_37, %c0_38] : memref<1x2x32xf32, #tpu.memory_space<vmem>>, vector<1x2x32xf32>
      %117 = vector.shape_cast %116 : vector<1x2x32xf32> to vector<2x32xf32>
      %118 = vector.shape_cast %115 : vector<2x32xf32> to vector<1x2x32xf32>
      tpu.vector_store %arg7[%c0_36, %c0_37, %c0_38], %118 {strides = array<i32>} : memref<1x2x32xf32, #tpu.memory_space<vmem>>, vector<1x2x32xf32>,
    } else {
    }
    return
  }
  func.func @transform_0(%arg0: i32, %arg1: i32) -> (i32, i32, i32) {
    %c0_i32 = arith.constant 0 : i32
    %c0_i32_0 = arith.constant 0 : i32
    return %arg0, %c0_i32, %arg1 : i32, i32, i32
  }
  func.func @transform_1(%arg0: i32, %arg1: i32) -> (i32, i32, i32) {
    %c0_i32 = arith.constant 0 : i32
    %c0_i32_0 = arith.constant 0 : i32
    return %arg0, %c0_i32, %arg1 : i32, i32, i32
  }
  func.func @transform_2(%arg0: i32, %arg1: i32) -> (i32, i32) {
    %c0_i32 = arith.constant 0 : i32
    %c0_i32_0 = arith.constant 0 : i32
    %c0_i32_1 = arith.constant 0 : i32
    return %c0_i32, %c0_i32_0 : i32, i32
  }
  func.func @transform_3(%arg0: i32, %arg1: i32) -> (i32, i32) {
    %c0_i32 = arith.constant 0 : i32
    %c0_i32_0 = arith.constant 0 : i32
    %c0_i32_1 = arith.constant 0 : i32
    return %c0_i32, %c0_i32_0 : i32, i32
  }
  func.func @transform_4(%arg0: i32, %arg1: i32) -> (i32, i32) {
    %c0_i32 = arith.constant 0 : i32
    %c0_i32_0 = arith.constant 0 : i32
    %c0_i32_1 = arith.constant 0 : i32
    return %c0_i32, %c0_i32_0 : i32, i32
  }
  func.func @transform_5(%arg0: i32, %arg1: i32) -> (i32, i32, i32) {
    %c0_i32 = arith.constant 0 : i32
    %c0_i32_0 = arith.constant 0 : i32
    %c0_i32_1 = arith.constant 0 : i32
    return %arg0, %c0_i32, %c0_i32_0 : i32, i32, i32
  }
}

</mosaic_0001>

<llo_original>
// kernel: _lambda_.1
$region0: #{_lambda_.1}
  #allocation0 [shape = 'u32[]', space=smem, size = 0x4, offset = 0x4, fixed_abs, tag = 'smem constant byte address 0x4 - core index']
  #allocation1 [shape = 'u32[72,128]{1,0:T(1,128)}', space=vmem, size = 0x9000, scoped, tag = 'internal scratch']
  #allocation2 [shape = 'f32[3,32]{1,0:T(4,128)}', space=vmem, size = 0x800, scoped, tag = 'scratch operand']
  %s0 = inlined_call_operand.vmem [shape: f32[2,1,200], index: 0, kind: input, shape index: {}]
  %s1 = inlined_call_operand.vmem [shape: f32[2,2,200], index: 1, kind: input, shape index: {}]
  %s2 = inlined_call_operand.vmem [shape: f32[16,4], index: 2, kind: input, shape index: {}]
  %s3 = inlined_call_operand.vmem [shape: f32[2,16], index: 3, kind: input, shape index: {}]
  %s4 = inlined_call_operand.vmem [shape: f32[16,4], index: 4, kind: input, shape index: {}]
  %s5 = inlined_call_operand.hbm [shape: f32[2,2,32], index: 5, kind: output, shape index: {}]
  %s6 = sld [smem:[#allocation0]]
  $region61: #{_lambda_.1} parent=0
    _
  %s8 = ssub.s32 1, %s6
  %s9 = scalar_select 0, %s8, %s6
  $region1: #{_lambda_.1} parent=0
    #allocation3 [shape = 'u8[2048]{0}', space=vmem, size = 0x800, scoped, tag = 'output window, operand 0']
    #allocation4 [shape = 's32[2]{0}', space=sflag, size = 0x8, scoped, tag = 'scoped memory for _lambda_.1']
    %10 = vsyncpa [#allocation4], 0
    %s11 = scalar_lea.sflag [#allocation4], 1
    %12 = vsyncpa %s11, 0
    loop: start=0, step=1, limit=6
    $region2: #{_lambda_.1} parent=1 // loop_pre_header
      _
    $region3: #{_lambda_.1} parent=1 // loop_header
      %s14 = sphi 0, %s18
      %p15 = scmp.ge.s32.totalorder %s14, 6
      %s21 = sphi 0, %s33
      %s22 = sphi 0, %s29
      %s23 = sphi 0, %s21
      %s24 = sphi 0, %s22
      %s25 = sphi 0, %s23
      %s26 = sphi 0, %s24
      %s38 = sphi 0, %s40
      %s41 = sphi 0, %s38
      %s42 = sphi 0, %s41
      %s58 = sphi 0, %s42
      %s66 = sphi 0, %s68
      %s69 = sphi 0, %s66
      %s70 = sphi 0, %s69
      %s86 = sphi 0, %s70
      %s90 = sphi 0, %s90
      %s92 = sphi 0, %s90
      %s93 = sphi 0, %s92
      %s107 = sphi 0, %s93
      %s111 = sphi 0, %s111
      %s113 = sphi 0, %s111
      %s114 = sphi 0, %s113
      %s128 = sphi 0, %s114
      %s132 = sphi 0, %s132
      %s134 = sphi 0, %s132
      %s135 = sphi 0, %s134
      %s149 = sphi 0, %s135
      %s155 = sphi 0, %s157
      %s158 = sphi 0, %s155
      %s159 = sphi 0, %s158
      %s175 = sphi 0, %s159
    $region4: #{_lambda_.1} parent=1 // loop_header_branch
      %17 = sbr.rel (%p15) target = $region8
    $region5: #{_lambda_.1} parent=1 // loop_body
      %s19 = ssub.s32 %s14, 1
      %s20 = ssub.s32 %s14, 2
      %s27 = sadd.s32 1, %s22
      %p28 = scmp.ge.s32.totalorder %s27, 2
      %s29 = scalar_select %p28, 0, %s27
      %s30 = sadd.s32 1, %s21
      %s31 = scalar_select %p28, %s30, %s21
      %p32 = scmp.ge.s32.totalorder %s31, 2
      %s33 = scalar_select %p32, 0, %s31
      %s34 = ssub.s32 %s21, %s33
      %s35 = ssub.s32 %s22, %s29
      %s36 = sor.u32 %s34, %s35
      %p37 = scmp.eq.s32.totalorder %s36, 0
      %s39 = sadd.s32 %s38, 1
      %s40 = scalar_select %p37, %s38, %s39
      %p43 = pneg %p37
      %p44 = scmp.eq.s32.totalorder %s14, 3
      %p45 = por %p43, %p44
      %p46 = scmp.ne.s32.totalorder %s38, %s41
      %p47 = scmp.eq.s32.totalorder %s14, 0
      %p48 = por %p46, %p47
      %p49 = scmp.ne.s32.totalorder %s38, %s41
      %p50 = scmp.eq.s32.totalorder %s19, 3
      %p51 = por %p49, %p50
      %p52 = scmp.ne.s32.totalorder %s41, %s42
      %p53 = scmp.eq.s32.totalorder %s19, 0
      %p54 = por %p52, %p53
      %p55 = scmp.ne.s32.totalorder %s41, %s42
      %p56 = scmp.eq.s32.totalorder %s20, 3
      %p57 = por %p55, %p56
      %p59 = scmp.ne.s32.totalorder %s42, %s58
      %p60 = scmp.eq.s32.totalorder %s20, 0
      %p61 = por %p59, %p60
      %s62 = ssub.s32 %s21, %s33
      %s63 = ssub.s32 %s22, %s29
      %s64 = sor.u32 %s62, %s63
      %p65 = scmp.eq.s32.totalorder %s64, 0
      %s67 = sadd.s32 %s66, 1
      %s68 = scalar_select %p65, %s66, %s67
      %p71 = pneg %p65
      %p72 = scmp.eq.s32.totalorder %s14, 3
      %p73 = por %p71, %p72
      %p74 = scmp.ne.s32.totalorder %s66, %s69
      %p75 = scmp.eq.s32.totalorder %s14, 0
      %p76 = por %p74, %p75
      %p77 = scmp.ne.s32.totalorder %s66, %s69
      %p78 = scmp.eq.s32.totalorder %s19, 3
      %p79 = por %p77, %p78
      %p80 = scmp.ne.s32.totalorder %s69, %s70
      %p81 = scmp.eq.s32.totalorder %s19, 0
      %p82 = por %p80, %p81
      %p83 = scmp.ne.s32.totalorder %s69, %s70
      %p84 = scmp.eq.s32.totalorder %s20, 3
      %p85 = por %p83, %p84
      %p87 = scmp.ne.s32.totalorder %s70, %s86
      %p88 = scmp.eq.s32.totalorder %s20, 0
      %p89 = por %p87, %p88
      %s91 = sadd.s32 %s90, 1
      %p94 = scmp.eq.s32.totalorder %s14, 3
      %p95 = scmp.ne.s32.totalorder %s90, %s92
      %p96 = scmp.eq.s32.totalorder %s14, 0
      %p97 = por %p95, %p96
      %p98 = scmp.ne.s32.totalorder %s90, %s92
      %p99 = scmp.eq.s32.totalorder %s19, 3
      %p100 = por %p98, %p99
      %p101 = scmp.ne.s32.totalorder %s92, %s93
      %p102 = scmp.eq.s32.totalorder %s19, 0
      %p103 = por %p101, %p102
      %p104 = scmp.ne.s32.totalorder %s92, %s93
      %p105 = scmp.eq.s32.totalorder %s20, 3
      %p106 = por %p104, %p105
      %p108 = scmp.ne.s32.totalorder %s93, %s107
      %p109 = scmp.eq.s32.totalorder %s20, 0
      %p110 = por %p108, %p109
      %s112 = sadd.s32 %s111, 1
      %p115 = scmp.eq.s32.totalorder %s14, 3
      %p116 = scmp.ne.s32.totalorder %s111, %s113
      %p117 = scmp.eq.s32.totalorder %s14, 0
      %p118 = por %p116, %p117
      %p119 = scmp.ne.s32.totalorder %s111, %s113
      %p120 = scmp.eq.s32.totalorder %s19, 3
      %p121 = por %p119, %p120
      %p122 = scmp.ne.s32.totalorder %s113, %s114
      %p123 = scmp.eq.s32.totalorder %s19, 0
      %p124 = por %p122, %p123
      %p125 = scmp.ne.s32.totalorder %s113, %s114
      %p126 = scmp.eq.s32.totalorder %s20, 3
      %p127 = por %p125, %p126
      %p129 = scmp.ne.s32.totalorder %s114, %s128
      %p130 = scmp.eq.s32.totalorder %s20, 0
      %p131 = por %p129, %p130
      %s133 = sadd.s32 %s132, 1
      %p136 = scmp.eq.s32.totalorder %s14, 3
      %p137 = scmp.ne.s32.totalorder %s132, %s134
      %p138 = scmp.eq.s32.totalorder %s14, 0
      %p139 = por %p137, %p138
      %p140 = scmp.ne.s32.totalorder %s132, %s134
      %p141 = scmp.eq.s32.totalorder %s19, 3
      %p142 = por %p140, %p141
      %p143 = scmp.ne.s32.totalorder %s134, %s135
      %p144 = scmp.eq.s32.totalorder %s19, 0
      %p145 = por %p143, %p144
      %p146 = scmp.ne.s32.totalorder %s134, %s135
      %p147 = scmp.eq.s32.totalorder %s20, 3
      %p148 = por %p146, %p147
      %p150 = scmp.ne.s32.totalorder %s135, %s149
      %p151 = scmp.eq.s32.totalorder %s20, 0
      %p152 = por %p150, %p151
      %s153 = ssub.s32 %s21, %s33
      %p154 = scmp.eq.s32.totalorder %s153, 0
      %s156 = sadd.s32 %s155, 1
      %s157 = scalar_select %p154, %s155, %s156
      %p160 = pneg %p154
      %p161 = scmp.eq.s32.totalorder %s14, 3
      %p162 = por %p160, %p161
      %p163 = scmp.ne.s32.totalorder %s155, %s158
      %p164 = scmp.eq.s32.totalorder %s14, 0
      %p165 = por %p163, %p164
      %p166 = scmp.ne.s32.totalorder %s155, %s158
      %p167 = scmp.eq.s32.totalorder %s19, 3
      %p168 = por %p166, %p167
      %p169 = scmp.ne.s32.totalorder %s158, %s159
      %p170 = scmp.eq.s32.totalorder %s19, 0
      %p171 = por %p169, %p170
      %p172 = scmp.ne.s32.totalorder %s158, %s159
      %p173 = scmp.eq.s32.totalorder %s20, 3
      %p174 = por %p172, %p173
      %p176 = scmp.ne.s32.totalorder %s159, %s175
      %p177 = scmp.eq.s32.totalorder %s20, 0
      %p178 = por %p176, %p177
      %p179 = scmp.le.s32.totalorder 1, %s14
      %p180 = scmp.lt.s32.totalorder %s14, 5
      %p181 = pnand %p179, %p180
      %p182 = pneg %p181
      // Predicated region
      $region9: #{_lambda_.1} parent=5 // pred_check
        _
      $region10: #{_lambda_.1} parent=5 // pred_check_branch
        %184 = sbr.rel (%p181) target = $region12
      $region11: #{_lambda_.1} parent=5 // pred_region
        %s185 = ssub.s32 %s14, 1
        // Predicated region
        $region13: #{_lambda_.1} parent=11 // pred_check
          %p186 = pneg %p103
        $region14: #{_lambda_.1} parent=11 // pred_check_branch
          %188 = sbr.rel (%p186) target = $region16
        $region15: #{_lambda_.1} parent=11 // pred_region
          _
        $region16: #{_lambda_.1} parent=11 // pred_fallthru
          _
        // Predicated region
        $region17: #{_lambda_.1} parent=11 // pred_check
          %p189 = pneg %p124
        $region18: #{_lambda_.1} parent=11 // pred_check_branch
          %191 = sbr.rel (%p189) target = $region20
        $region19: #{_lambda_.1} parent=11 // pred_region
          _
        $region20: #{_lambda_.1} parent=11 // pred_fallthru
          _
        // Predicated region
        $region21: #{_lambda_.1} parent=11 // pred_check
          %p192 = pneg %p145
        $region22: #{_lambda_.1} parent=11 // pred_check_branch
          %194 = sbr.rel (%p192) target = $region24
        $region23: #{_lambda_.1} parent=11 // pred_region
          _
        $region24: #{_lambda_.1} parent=11 // pred_fallthru
          _
      $region12: #{_lambda_.1} parent=5 // pred_fallthru
        _
      %p195 = scmp.lt.s32.totalorder %s14, 4
      // Predicated region
      $region25: #{_lambda_.1} parent=5 // pred_check
        %p196 = pneg %p195
      $region26: #{_lambda_.1} parent=5 // pred_check_branch
        %198 = sbr.rel (%p196) target = $region28
      $region27: #{_lambda_.1} parent=5 // pred_region
        // Predicated region
        $region29: #{_lambda_.1} parent=27 // pred_check
          %p199 = pneg %p48
        $region30: #{_lambda_.1} parent=27 // pred_check_branch
          %201 = sbr.rel (%p199) target = $region32
        $region31: #{_lambda_.1} parent=27 // pred_region
          %p202 = scmp.lt.s32.totalorder %s21, 1
          %s203 = scalar_select %p202, %s21, 1
          %p204 = scmp.lt.s32.totalorder %s22, 1
          %s205 = scalar_select %p204, %s22, 1
          %s206 = smul.addr %s203, 2
          %s207 = sadd.s32 %s205, %s206
          %s208 = scalar_lea.vmem %s0, %s207
        $region32: #{_lambda_.1} parent=27 // pred_fallthru
          _
        // Predicated region
        $region33: #{_lambda_.1} parent=27 // pred_check
          %p209 = pneg %p76
        $region34: #{_lambda_.1} parent=27 // pred_check_branch
          %211 = sbr.rel (%p209) target = $region36
        $region35: #{_lambda_.1} parent=27 // pred_region
          %p212 = scmp.lt.s32.totalorder %s21, 1
          %s213 = scalar_select %p212, %s21, 1
          %p214 = scmp.lt.s32.totalorder %s22, 1
          %s215 = scalar_select %p214, %s22, 1
          %s216 = smul.addr %s213, 2
          %s217 = sadd.s32 %s215, %s216
          %s218 = smul.addr %s217, 2
          %s219 = scalar_lea.vmem %s1, %s218
        $region36: #{_lambda_.1} parent=27 // pred_fallthru
          _
      $region28: #{_lambda_.1} parent=5 // pred_fallthru
        _
      %p220 = scmp.le.s32.totalorder 1, %s14
      %p221 = scmp.lt.s32.totalorder %s14, 5
      %p222 = pnand %p220, %p221
      %p223 = pneg %p222
      // Predicated region
      $region37: #{_lambda_.1} parent=5 // pred_check
        _
      $region38: #{_lambda_.1} parent=5 // pred_check_branch
        %225 = sbr.rel (%p222) target = $region40
      $region39: #{_lambda_.1} parent=5 // pred_region
        %s226 = ssub.s32 %s14, 1
        %p227 = scmp.lt.s32.totalorder %s23, 1
        %s228 = scalar_select %p227, %s23, 1
        %p229 = scmp.lt.s32.totalorder %s24, 1
        %s230 = scalar_select %p229, %s24, 1
        %s231 = smul.addr %s228, 2
        %s232 = sadd.s32 %s230, %s231
        %s233 = scalar_lea.vmem %s0, %s232
        %p234 = pneg %p54
        %p235 = pneg %p51
        %p236 = scmp.lt.s32.totalorder %s23, 1
        %s237 = scalar_select %p236, %s23, 1
        %p238 = scmp.lt.s32.totalorder %s24, 1
        %s239 = scalar_select %p238, %s24, 1
        %s240 = smul.addr %s237, 2
        %s241 = sadd.s32 %s239, %s240
        %s242 = smul.addr %s241, 2
        %s243 = scalar_lea.vmem %s1, %s242
        %p244 = pneg %p82
        %p245 = pneg %p79
        %p246 = pneg %p103
        %p247 = pneg %p100
        %p248 = pneg %p124
        %p249 = pneg %p121
        %p250 = pneg %p145
        %p251 = pneg %p142
        %p252 = pneg %p171
        %p253 = pneg %p168
        %s254 = sand.u32 %s158, 1
        %s255 = scalar_lea.sflag [#allocation4], %s254
        %s256 = sand.u32 %s158, 1
        %s257 = smul.addr %s256, 2
        %s258 = scalar_lea.vmem [#allocation3], %s257
        %p259 = scmp.lt.s32.totalorder %s23, 1
        %s260 = scalar_select %p259, %s23, 1
        %p261 = scmp.lt.s32.totalorder %s24, 1
        %s262 = scalar_select %p261, %s24, 1
        %s263 = smul.addr %s260, 2
        %s264 = sadd.s32 %s262, %s263
        %s265 = scalar_lea.vmem %s0, %s264
        %p266 = scmp.lt.s32.totalorder %s23, 1
        %s267 = scalar_select %p266, %s23, 1
        %p268 = scmp.lt.s32.totalorder %s24, 1
        %s269 = scalar_select %p268, %s24, 1
        %s270 = smul.addr %s267, 2
        %s271 = sadd.s32 %s269, %s270
        %s272 = smul.addr %s271, 2
        %s273 = scalar_lea.vmem %s1, %s272
        %p274 = scmp.eq.s32.totalorder %s24, 0
        // Predicated region
        $region41: #{_lambda_.1} parent=39 // pred_check
          %p275 = pneg %p274
        $region42: #{_lambda_.1} parent=39 // pred_check_branch
          %277 = sbr.rel (%p275) target = $region44
        $region43: #{_lambda_.1} parent=39 // pred_region
          %vm278 = vcmask 256000
          %279 = vst.msk [vmem:[#allocation2] sm:$0x7] %vm278, 0.0
        $region44: #{_lambda_.1} parent=39 // pred_fallthru
          _
        %v280 = vld [vmem:[%s265] sm:$0x1]
        %v281 = vld [vmem:[%s273] sm:$0x3]
        %v282 = vlaneseq
        %v283 = vand.u32 %v282, 127
        %s284 = smul.u32 %s24, 128
        %v285 = vstv %s284
        %v286 = vadd.s32 %v285, %v283
        %vm287 = vcmp.lt.s32.totalorder %v286, 200
        %v288 = vsub.f32 %v280, 0.016129032
        %v289 = vrcp.pop 0.032258064
        %v290 = vmul.f32 0.032258064, %v289
        %v291 = vsub.f32 1.0, %v290
        %v292 = vmul.f32 %v289, %v291
        %v293 = vadd.f32 %v289, %v292
        %vm294 = vweird.f32 %v289
        %v295 = vsel %vm294, %v289, %v293
        %v296 = vmul.f32 %v288, %v295
        %v297 = vceil.f32 %v296
        %v298 = vmul.f32 %v297, 0.032258064
        %v299 = vadd.f32 %v298, 0.0
        %v300 = vcvt.f32.s32.to.zero.pseudo %v297
        %v301 = vsel %vm287, %v300, 4294967295
        %v302 = vlaneseq
        %v303 = vshrl.u32 %v302, 7
        %v304 = vadd.s32 %v303, 8
        %v305 = vadd.s32 %v303, 16
        %v306 = vadd.s32 %v303, 24
        %v307 = vperm.slane %v301, 0
        %vm308 = vcmp.eq.s32.totalorder %v303, %v307
        %vm309 = vcmp.eq.s32.totalorder %v304, %v307
        %vm310 = vcmp.eq.s32.totalorder %v305, %v307
        %vm311 = vcmp.eq.s32.totalorder %v306, %v307
        %v312 = vsel %vm308, 1, 0
        %v313 = vsel %vm309, 1, 0
        %v314 = vsel %vm310, 1, 0
        %v315 = vsel %vm311, 1, 0
        %v316 = vcvt.s32.f32 %v312
        %v317 = vcvt.s32.f32 %v313
        %v318 = vcvt.s32.f32 %v314
        %v319 = vcvt.s32.f32 %v315
        %v320 = vld [vmem:[%s4] sm:$0xff]
        %v321 = vld [vmem:[%s4 + $0x8] sm:$0xff]
        %v322 = vld [vmem:[%s2] sm:$0xff]
        %v323 = vld [vmem:[%s2 + $0x8] sm:$0xff]
        %325 = vset.pattern.permute.xlu0 0
        %326 = vperm.xlu0 %325, %v322
        %v327 = vpop.permute.xlu0 %326
        %330 = vset.pattern.permute.xlu0 0
        %331 = vperm.xlu0 %330, %v323
        %v332 = vpop.permute.xlu0 %331
        %v335 = vperm.slane %v280, 0
        %v337 = vmul.f32 %v327, %v335
        %v338 = vmul.f32 %v332, %v335
        %339 = vset.pattern.permute.xlu0 1
        %340 = vperm.xlu0 %339, %v322
        %v341 = vpop.permute.xlu0 %340
        %343 = vset.pattern.permute.xlu0 1
        %344 = vperm.xlu0 %343, %v323
        %v345 = vpop.permute.xlu0 %344
        %v348 = vperm.slane %v299, 0
        %v350 = vmul.f32 %v341, %v348
        %v351 = vmul.f32 %v345, %v348
        %v352 = vadd.f32 %v337, %v350
        %v353 = vadd.f32 %v338, %v351
        %355 = vset.pattern.permute.xlu0 0
        %356 = vperm.xlu0 %355, %v320
        %v357 = vpop.permute.xlu0 %356
        %360 = vset.pattern.permute.xlu0 0
        %361 = vperm.xlu0 %360, %v321
        %v362 = vpop.permute.xlu0 %361
        %v364 = vadd.f32 %v352, %v357
        %v365 = vadd.f32 %v353, %v362
        %366 = vset.pattern.permute.xlu0 2
        %367 = vperm.xlu0 %366, %v322
        %v368 = vpop.permute.xlu0 %367
        %370 = vset.pattern.permute.xlu0 2
        %371 = vperm.xlu0 %370, %v323
        %v372 = vpop.permute.xlu0 %371
        %v374 = vperm.slane %v281, 0
        %v375 = vmul.f32 %v368, %v374
        %v376 = vmul.f32 %v372, %v374
        %v377 = vadd.f32 %v364, %v375
        %v378 = vadd.f32 %v365, %v376
        %379 = vset.pattern.permute.xlu0 3
        %380 = vperm.xlu0 %379, %v322
        %v381 = vpop.permute.xlu0 %380
        %383 = vset.pattern.permute.xlu0 3
        %384 = vperm.xlu0 %383, %v323
        %v385 = vpop.permute.xlu0 %384
        %v387 = vperm.slane %v281, 1
        %v388 = vmul.f32 %v381, %v387
        %v389 = vmul.f32 %v385, %v387
        %v390 = vadd.f32 %v377, %v388
        %v391 = vadd.f32 %v378, %v389
        %v392 = vadd.f32 %v390, %v391
        %v393 = vrot.slane %v392, 4
        %v394 = vadd.f32 %v392, %v393
        %v395 = vrot.slane %v394, 2
        %v396 = vadd.f32 %v394, %v395
        %v397 = vrot.slane %v396, 1
        %v398 = vadd.f32 %v396, %v397
        %v399 = vrcp.pop 16.0
        %v400 = vmul.f32 16.0, %v399
        %v401 = vsub.f32 1.0, %v400
        %v402 = vmul.f32 %v399, %v401
        %v403 = vadd.f32 %v399, %v402
        %vm404 = vweird.f32 %v399
        %v405 = vsel %vm404, %v399, %v403
        %v406 = vmul.f32 %v398, %v405
        %v407 = vsub.f32 %v390, %v406
        %v408 = vsub.f32 %v391, %v406
        %v409 = vmul.f32 %v407, %v407
        %v410 = vmul.f32 %v408, %v408
        %v411 = vadd.f32 %v409, %v410
        %v412 = vrot.slane %v411, 4
        %v413 = vadd.f32 %v411, %v412
        %v414 = vrot.slane %v413, 2
        %v415 = vadd.f32 %v413, %v414
        %v416 = vrot.slane %v415, 1
        %v417 = vadd.f32 %v415, %v416
        %v418 = vmul.f32 %v417, %v405
        %v419 = vadd.f32 %v418, 1e-05
        %v420 = vrsqrt.pop %v419
        %v421 = vmul.f32 %v420, %v419
        %v422 = vmul.f32 %v421, %v420
        %v423 = vmul.f32 0.5, %v422
        %v424 = vsub.f32 1.5, %v423
        %v425 = vmul.f32 %v420, %v424
        %vm426 = vweird.f32 %v419
        %vm427 = vweird.f32 %v420
        %vm428 = vmor %vm426, %vm427
        %v429 = vsel %vm428, %v420, %v425
        %v430 = vmul.f32 %v407, %v429
        %v431 = vmul.f32 %v408, %v429
        %432 = vset.pattern.permute.xlu0 1
        %433 = vperm.xlu0 %432, %v320
        %v434 = vpop.permute.xlu0 %433
        %436 = vset.pattern.permute.xlu0 1
        %437 = vperm.xlu0 %436, %v321
        %v438 = vpop.permute.xlu0 %437
        %v440 = vmul.f32 %v430, %v434
        %v441 = vmul.f32 %v431, %v438
        %442 = vset.pattern.permute.xlu0 2
        %443 = vperm.xlu0 %442, %v320
        %v444 = vpop.permute.xlu0 %443
        %446 = vset.pattern.permute.xlu0 2
        %447 = vperm.xlu0 %446, %v321
        %v448 = vpop.permute.xlu0 %447
        %v450 = vadd.f32 %v440, %v444
        %v451 = vadd.f32 %v441, %v448
        %v452 = vmul.f32 %v450, 0.5
        %v453 = vmul.f32 %v451, 0.5
        %v454 = vmul.f32 %v450, 0.70710677
        %v455 = vmul.f32 %v451, 0.70710677
        %v456 = vmul.f32 %v454, %v454
        %v457 = vmin.f32 16.0, %v456
        %v458 = vmul.f32 %v457, 2.1237322e-06
        %v459 = vadd.f32 %v458, 0.00028619796
        %v460 = vmul.f32 %v457, %v459
        %v461 = vadd.f32 %v460, 0.0036580483
        %v462 = vmul.f32 %v457, %v461
        %v463 = vadd.f32 %v462, 0.05243302
        %v464 = vmul.f32 %v457, %v463
        %v465 = vadd.f32 %v464, 0.18741608
        %v466 = vmul.f32 %v457, %v465
        %v467 = vadd.f32 %v466, 1.1283791
        %v468 = vmul.f32 %v454, %v467
        %v469 = vmul.f32 %v457, 3.8918573e-05
        %v470 = vadd.f32 %v469, 0.001143296
        %v471 = vmul.f32 %v457, %v470
        %v472 = vadd.f32 %v471, 0.014752088
        %v473 = vmul.f32 %v457, %v472
        %v474 = vadd.f32 %v473, 0.112945676
        %v475 = vmul.f32 %v457, %v474
        %v476 = vadd.f32 %v475, 0.4994258
        %v477 = vmul.f32 %v457, %v476
        %v478 = vadd.f32 %v477, 1.0
        %v479 = vrcp.pop %v478
        %v480 = vmul.f32 %v478, %v479
        %v481 = vsub.f32 1.0, %v480
        %v482 = vmul.f32 %v479, %v481
        %v483 = vadd.f32 %v479, %v482
        %vm484 = vweird.f32 %v478
        %vm485 = vweird.f32 %v479
        %vm486 = vmor %vm484, %vm485
        %v487 = vsel %vm486, %v479, %v483
        %v488 = vand.u32 2147483647, %v478
        %vm489 = vcmp.eq.f32.partialorder %v488, 8.507059e+37
        %v490 = vand.u32 %v478, 2147483648
        %v491 = vor.u32 1.1754944e-38, %v490
        %v492 = vsel %vm489, %v491, %v487
        %v493 = vmul.f32 %v468, %v492
        %v494 = vmin.f32 %v493, 1.0
        %v495 = vmax.f32 %v494, -1.0
        %v496 = vmul.f32 %v455, %v455
        %v497 = vmin.f32 16.0, %v496
        %v498 = vmul.f32 %v497, 2.1237322e-06
        %v499 = vadd.f32 %v498, 0.00028619796
        %v500 = vmul.f32 %v497, %v499
        %v501 = vadd.f32 %v500, 0.0036580483
        %v502 = vmul.f32 %v497, %v501
        %v503 = vadd.f32 %v502, 0.05243302
        %v504 = vmul.f32 %v497, %v503
        %v505 = vadd.f32 %v504, 0.18741608
        %v506 = vmul.f32 %v497, %v505
        %v507 = vadd.f32 %v506, 1.1283791
        %v508 = vmul.f32 %v455, %v507
        %v509 = vmul.f32 %v497, 3.8918573e-05
        %v510 = vadd.f32 %v509, 0.001143296
        %v511 = vmul.f32 %v497, %v510
        %v512 = vadd.f32 %v511, 0.014752088
        %v513 = vmul.f32 %v497, %v512
        %v514 = vadd.f32 %v513, 0.112945676
        %v515 = vmul.f32 %v497, %v514
        %v516 = vadd.f32 %v515, 0.4994258
        %v517 = vmul.f32 %v497, %v516
        %v518 = vadd.f32 %v517, 1.0
        %v519 = vrcp.pop %v518
        %v520 = vmul.f32 %v518, %v519
        %v521 = vsub.f32 1.0, %v520
        %v522 = vmul.f32 %v519, %v521
        %v523 = vadd.f32 %v519, %v522
        %vm524 = vweird.f32 %v518
        %vm525 = vweird.f32 %v519
        %vm526 = vmor %vm524, %vm525
        %v527 = vsel %vm526, %v519, %v523
        %v528 = vand.u32 2147483647, %v518
        %vm529 = vcmp.eq.f32.partialorder %v528, 8.507059e+37
        %v530 = vand.u32 %v518, 2147483648
        %v531 = vor.u32 1.1754944e-38, %v530
        %v532 = vsel %vm529, %v531, %v527
        %v533 = vmul.f32 %v508, %v532
        %v534 = vmin.f32 %v533, 1.0
        %v535 = vmax.f32 %v534, -1.0
        %v536 = vadd.f32 %v495, 1.0
        %v537 = vadd.f32 %v535, 1.0
        %v538 = vmul.f32 %v452, %v536
        %v539 = vmul.f32 %v453, %v537
        %v540 = vld [vmem:[%s3] sm:$0x3]
        %541 = vset.pattern.permute.xlu0 3
        %542 = vperm.xlu0 %541, %v320
        %v543 = vpop.permute.xlu0 %542
        %vm545 = vcmask 130048
        %v547 = vsel %vm545, %v540, 0
        %549 = vmatpush.msra.mxu0 0.0
        %550 = vmatpush.msra.mxu0 0.0
        %551 = vmatpush.msra.mxu0 0.0
        %552 = vmatpush.msra.mxu0 0.0
        %553 = vmatpush.msra.mxu0 0.0
        %554 = vmatpush.msra.mxu0 0.0
        %555 = vmatpush.msra.mxu0 0.0
        %556 = vmatpush.msra.mxu0 0.0
        %557 = vmatpush.msra.mxu0 0.0
        %558 = vmatpush.msra.mxu0 0.0
        %559 = vmatpush.msra.mxu0 0.0
        %560 = vmatpush.msra.mxu0 0.0
        %561 = vmatpush.msra.mxu0 0.0
        %562 = vmatpush.msra.mxu0 0.0
        %563 = vmatpush.msra.mxu0 %v539
        %564 = vmatpush.msra.mxu0 %v538
        %565 = vmatmul.f32.gmra.mxu0 %v547
        %v566 = vpop.f32.mrf.mxu0
        %v567 = vadd.f32 %v543, %v566
        %568 = vdwg.mxu0
        %v569 = vmul.f32 %v567, %v281
        %v570 = vsel %vm287, 1, 0
        %vm571 = vcmp.eq.s32.totalorder %v570, 1
        %v572 = vsel %vm571, %v569, 0.0
        %vm573 = vcmask 1041408
        %v574 = vsel %vm573, %v572, 1.0
        %v575 = vld [vmem:[#allocation2] sm:$0x7]
        %576 = vmatpush.xpose.msra.mxu0 0.0
        %577 = vmatpush.xpose.msra.mxu0 0.0
        %578 = vmatpush.xpose.msra.mxu0 0.0
        %579 = vmatpush.xpose.msra.mxu0 0.0
        %580 = vmatpush.xpose.msra.mxu0 0.0
        %581 = vmatpush.xpose.msra.mxu0 0.0
        %582 = vmatpush.xpose.msra.mxu0 0.0
        %583 = vmatpush.xpose.msra.mxu0 0.0
        %584 = vmatpush.xpose.msra.mxu0 0.0
        %585 = vmatpush.xpose.msra.mxu0 0.0
        %586 = vmatpush.xpose.msra.mxu0 0.0
        %587 = vmatpush.xpose.msra.mxu0 0.0
        %588 = vmatpush.xpose.msra.mxu0 %v319
        %589 = vmatpush.xpose.msra.mxu0 %v318
        %590 = vmatpush.xpose.msra.mxu0 %v317
        %591 = vmatpush.xpose.msra.mxu0 %v316
        %592 = vmatmul.f32.gmra.mxu0 %v574
        %v593 = vpop.f32.mrf.mxu0
        %v594 = vadd.f32 0.0, %v593
        %595 = vdwg.mxu0
        %v596 = vadd.f32 %v575, %v594
        %vm597 = vcmask 256000
        %598 = vst.msk [vmem:[#allocation2] sm:$0x7] %vm597, %v596
        %p599 = scmp.eq.s32.totalorder %s24, 1
        // Predicated region
        $region45: #{_lambda_.1} parent=39 // pred_check
          %p600 = pneg %p599
        $region46: #{_lambda_.1} parent=39 // pred_check_branch
          %602 = sbr.rel (%p600) target = $region48
        $region47: #{_lambda_.1} parent=39 // pred_region
          %v603 = vld [vmem:[#allocation2] sm:$0x7]
          %v604 = vmax.f32 %v603, 1.0
          %v605 = vperm.slane %v604, 2
          %v606 = vrcp.pop %v605
          %v607 = vmul.f32 %v605, %v606
          %v608 = vsub.f32 1.0, %v607
          %v609 = vmul.f32 %v606, %v608
          %v610 = vadd.f32 %v606, %v609
          %vm611 = vweird.f32 %v605
          %vm612 = vweird.f32 %v606
          %vm613 = vmor %vm611, %vm612
          %v614 = vsel %vm613, %v606, %v610
          %v615 = vand.u32 2147483647, %v605
          %vm616 = vcmp.eq.f32.partialorder %v615, 8.507059e+37
          %v617 = vand.u32 %v605, 2147483648
          %v618 = vor.u32 1.1754944e-38, %v617
          %v619 = vsel %vm616, %v618, %v614
          %v620 = vmul.f32 %v603, %v619
          %vm621 = vcmask 254976
          %622 = vst.msk [vmem:[%s258] sm:$0x3] %vm621, %v620
        $region48: #{_lambda_.1} parent=39 // pred_fallthru
          _
        %s623 = sand.u32 %s158, 1
        %s624 = scalar_lea.sflag [#allocation4], %s623
        %s625 = sand.u32 %s158, 1
        %s626 = smul.addr %s625, 2
        %s627 = scalar_lea.vmem [#allocation3], %s626
        // Predicated region
        $region49: #{_lambda_.1} parent=39 // pred_check
          %p628 = pneg %p168
        $region50: #{_lambda_.1} parent=39 // pred_check_branch
          %630 = sbr.rel (%p628) target = $region52
        $region51: #{_lambda_.1} parent=39 // pred_region
          %632 = vsyncadd %s624, 0
          %s633 = smul.addr %s23, 2
          %s634 = scalar_lea.hbm %s5, %s633
          %s636 = sshll.u32 %s627, 4
          %s637 = int_to_ptr.vmem [resolvable:$true] %s636
          %s638 = sshll.u32 %s634, 4
          %s639 = int_to_ptr.hbm [resolvable:$true] %s638
          %641 = dma.vmem_to_hbm [thread:$0]  %s637, 32, %s639, %s624
        $region52: #{_lambda_.1} parent=39 // pred_fallthru
          _
      $region40: #{_lambda_.1} parent=5 // pred_fallthru
        _
      %p642 = scmp.le.s32.totalorder 2, %s14
      // Predicated region
      $region53: #{_lambda_.1} parent=5 // pred_check
        %p643 = pneg %p642
      $region54: #{_lambda_.1} parent=5 // pred_check_branch
        %645 = sbr.rel (%p643) target = $region56
      $region55: #{_lambda_.1} parent=5 // pred_region
        %s646 = ssub.s32 %s14, 2
        // Predicated region
        $region57: #{_lambda_.1} parent=55 // pred_check
          %p647 = pneg %p174
        $region58: #{_lambda_.1} parent=55 // pred_check_branch
          %649 = sbr.rel (%p647) target = $region60
        $region59: #{_lambda_.1} parent=55 // pred_region
          %s650 = sand.u32 %s159, 1
          %s651 = scalar_lea.sflag [#allocation4], %s650
          %s652 = sand.u32 %s159, 1
          %s653 = smul.addr %s652, 2
          %s654 = scalar_lea.vmem [#allocation3], %s653
          %656 = dma.done %s651, 32
        $region60: #{_lambda_.1} parent=55 // pred_fallthru
          _
      $region56: #{_lambda_.1} parent=5 // pred_fallthru
        _
    $region6: #{_lambda_.1} parent=1 // loop_footer
      %s18 = sadd.s32 1, %s14
    $region7: #{_lambda_.1} parent=1 // loop_footer_branch
      %13 = sbr.rel target = $region3
    $region8: #{_lambda_.1} parent=1 // loop_exit
      _
    %657 = vsyncpa [#allocation4], 1
    %s658 = scalar_lea.sflag [#allocation4], 1
    %659 = vsyncpa %s658, 1

</llo_original>
